<compile_context>
chip_gen: v6e
topology: v6e:2x2x1
jax: 0.10.0
libtpu: 0.0.40
codegen_flags: <defaults>
</compile_context>

<pallas_src>
import functools

import jax
import jax.numpy as jnp
from jax.experimental import pallas as pl
from jax.experimental.pallas import tpu as pltpu

BN_EPS = 1e-5


# ---------------------------- Pallas kernels ----------------------------

def _matmul_bn_act_kernel(x_ref, w_ref, s_ref, b_ref, o_ref, *, relu):
    # (TM, Cin) @ (Cin, Cout) on the MXU (bf16 in, f32 acc), fused BN (+ ReLU).
    x = x_ref[...].astype(jnp.bfloat16)
    acc = jnp.dot(x, w_ref[...], preferred_element_type=jnp.float32)
    y = acc * s_ref[...] + b_ref[...]
    if relu:
        y = jnp.maximum(y, 0.0)
    o_ref[...] = y


def matmul_bn_act(x2d, w, scale, bias, relu):
    """y = act((x2d @ w) * scale + bias), tiled over 256-row blocks."""
    M, Cin = x2d.shape
    Cout = w.shape[1]
    TM = 256 if M >= 256 else max(8, -(-M // 8) * 8)
    Mp = -(-M // TM) * TM
    if Mp != M:
        x2d = jnp.pad(x2d, ((0, Mp - M), (0, 0)))
    kernel = functools.partial(_matmul_bn_act_kernel, relu=relu)
    out = pl.pallas_call(
        kernel,
        out_shape=jax.ShapeDtypeStruct((Mp, Cout), jnp.float32),
        grid=(Mp // TM,),
        in_specs=[
            pl.BlockSpec((TM, Cin), lambda i: (i, 0)),
            pl.BlockSpec((Cin, Cout), lambda i: (0, 0)),
            pl.BlockSpec((1, Cout), lambda i: (0, 0)),
            pl.BlockSpec((1, Cout), lambda i: (0, 0)),
        ],
        out_specs=pl.BlockSpec((TM, Cout), lambda i: (i, 0)),
        compiler_params=pltpu.CompilerParams(dimension_semantics=("parallel",)),
    )(x2d, w, scale, bias)
    return out[:M] if Mp != M else out


def _dsconv3_kernel(x_ref, dw_ref, pw_ref, s_ref, b_ref, o_ref, *, relu):
    # Fused stride-1 depthwise 3x3 + pointwise 1x1 + BN (+ ReLU).
    # x_ref: (1, TH+2, W+2, C) padded row-chunk; dw_ref: (3, 3, C);
    # pw_ref: (C, Cout) bf16; o_ref: (1, TH, W, Cout).
    TH, W, Cout = o_ref.shape[1], o_ref.shape[2], o_ref.shape[3]
    C = x_ref.shape[3]
    acc = jnp.zeros((TH, W, C), jnp.float32)
    for kh in range(3):
        for kw in range(3):
            tap = x_ref[0, kh:kh + TH, kw:kw + W, :]
            acc = acc + tap * dw_ref[kh, kw, :][None, None, :]
    y = acc.reshape(TH * W, C).astype(jnp.bfloat16)       # dw result stays in VMEM
    out = jnp.dot(y, pw_ref[...], preferred_element_type=jnp.float32)
    out = out * s_ref[...] + b_ref[...]
    if relu:
        out = jnp.maximum(out, 0.0)
    o_ref[0] = out.reshape(TH, W, Cout)


def dsconv3_fused(x, dw, pw, scale, bias, relu, cout):
    """Fused depthwise-3x3 (stride 1, pad 1) + pointwise + BN + ReLU."""
    N, H, W, C = x.shape
    xp = jnp.pad(x, ((0, 0), (1, 1), (1, 1), (0, 0)))
    # Row-chunk to bound VMEM block size and provide parallel grid work.
    TH = H
    for cand in range(min(H, 32), 0, -1):
        if H % cand == 0:
            TH = cand
            break
    nc = H // TH
    if nc > 1:
        chunks = [xp[:, i * TH:i * TH + TH + 2] for i in range(nc)]
        xin = jnp.stack(chunks, axis=1).reshape(N * nc, TH + 2, W + 2, C)
    else:
        xin = xp
    G = N * nc
    out = pl.pallas_call(
        functools.partial(_dsconv3_kernel, relu=relu),
        out_shape=jax.ShapeDtypeStruct((G, TH, W, cout), jnp.float32),
        grid=(G,),
        in_specs=[
            pl.BlockSpec((1, TH + 2, W + 2, C), lambda i: (i, 0, 0, 0)),
            pl.BlockSpec((3, 3, C), lambda i: (0, 0, 0)),
            pl.BlockSpec((C, cout), lambda i: (0, 0)),
            pl.BlockSpec((1, cout), lambda i: (0, 0)),
            pl.BlockSpec((1, cout), lambda i: (0, 0)),
        ],
        out_specs=pl.BlockSpec((1, TH, W, cout), lambda i: (i, 0, 0, 0)),
        compiler_params=pltpu.CompilerParams(dimension_semantics=("parallel",)),
    )(xin, dw, pw, scale, bias)
    return out.reshape(N, H, W, cout)


def _max4_kernel(a_ref, b_ref, c_ref, d_ref, o_ref):
    o_ref[...] = jnp.maximum(jnp.maximum(a_ref[...], b_ref[...]),
                             jnp.maximum(c_ref[...], d_ref[...]))


def maxpool2x2(x):
    """2x2/stride-2 max pool: max of 4 strided NHWC views (lane-dense)."""
    N, H, W, C = x.shape
    Ho, Wo = H // 2, W // 2            # floor mode, matches nn.MaxPool2d(2, 2)
    M = N * Ho * Wo
    views = [x[:, a:2 * Ho:2, b:2 * Wo:2, :].reshape(M, C)
             for a in (0, 1) for b in (0, 1)]
    TM = 256 if M >= 256 else max(8, -(-M // 8) * 8)
    Mp = -(-M // TM) * TM
    if Mp != M:
        views = [jnp.pad(v, ((0, Mp - M), (0, 0))) for v in views]
    out = pl.pallas_call(
        _max4_kernel,
        out_shape=jax.ShapeDtypeStruct((Mp, C), jnp.float32),
        grid=(Mp // TM,),
        in_specs=[pl.BlockSpec((TM, C), lambda i: (i, 0)) for _ in range(4)],
        out_specs=pl.BlockSpec((TM, C), lambda i: (i, 0)),
        compiler_params=pltpu.CompilerParams(dimension_semantics=("parallel",)),
    )(*views)
    return out[:M].reshape(N, Ho, Wo, C)


# ---------------------------- parameters ----------------------------

class KeyGen:
    def __init__(self, seed=0):
        self.key = jax.random.PRNGKey(seed)

    def __call__(self):
        self.key, sub = jax.random.split(self.key)
        return sub


def _bn_fold(cout):
    gamma = jnp.ones((cout,), jnp.float32)
    beta = jnp.zeros((cout,), jnp.float32)
    mean = jnp.zeros((cout,), jnp.float32)
    var = jnp.ones((cout,), jnp.float32)
    scale = gamma / jnp.sqrt(var + BN_EPS)
    bias = beta - mean * scale
    return scale.reshape(1, cout), bias.reshape(1, cout)


def make_convbn(kg, cin, cout, k=3, stride=1, relu=True):
    std = (2.0 / (cout * k * k)) ** 0.5   # kaiming normal, fan_out, relu
    w = std * jax.random.normal(kg(), (k, k, cin, cout), jnp.float32)
    scale, bias = _bn_fold(cout)
    return dict(kind="im2col", w=w.reshape(k * k * cin, cout).astype(jnp.bfloat16),
                stride=stride, relu=relu, scale=scale, bias=bias, cout=cout)


def make_dsconv(kg, nin, nout, k=3, stride=1, relu=True, final=False):
    dw_std = (2.0 / (nin * k * k)) ** 0.5
    dw = dw_std * jax.random.normal(kg(), (k, k, nin), jnp.float32)
    pw_std = 0.01 if final else (2.0 / nout) ** 0.5
    pw = pw_std * jax.random.normal(kg(), (nin, nout), jnp.float32)
    scale, bias = _bn_fold(nout)
    base = dict(relu=relu, scale=scale, bias=bias, cout=nout)
    if k == 1:
        # 1x1 depthwise (groups=nin) is a per-channel scale: fold it exactly
        # into the pointwise weight -> single matmul.
        w_mm = (dw.reshape(nin, 1) * pw).astype(jnp.bfloat16)
        return dict(kind="pw", w=w_mm, **base)
    if stride == 2:
        # Stride-2 3x3 DSConv as im2col + matmul with combined dw(x)pw weight:
        # out = patches @ W,  W[t*C+c, o] = dw[t, c] * pw[c, o].  Exact.
        w_mm = (dw.reshape(9, nin)[:, :, None] * pw[None, :, :]).reshape(9 * nin, nout)
        return dict(kind="im2col", w=w_mm.astype(jnp.bfloat16), stride=2, **base)
    return dict(kind="dsconv3", dw=dw, pw=pw.astype(jnp.bfloat16), **base)


def build_openpose(seed=0, conv_width=0.75, conv_width2=0.5):
    kg = KeyGen(seed)
    depth = lambda d: max(round(d * conv_width), 8)
    depth2 = lambda d: max(round(d * conv_width2), 8)

    model0 = [make_convbn(kg, 3, depth(32), 3, 2)]
    m0_cfg = [
        (depth(32), depth(64), 1), (depth(64), depth(128), 2),
        (depth(128), depth(128), 1), (depth(128), depth(256), 2),
        (depth(256), depth(256), 1), (depth(256), depth(512), 1),
        (depth(512), depth(512), 1), (depth(512), depth(512), 1),
        (depth(512), depth(512), 1), (depth(512), depth(512), 1),
        (depth(512), depth(512), 1),
    ]
    for nin, nout, s in m0_cfg:
        model0.append(make_dsconv(kg, nin, nout, 3, s))

    feat_ch = depth(1152)  # 864 = 96 + 384 + 384 (out_pool, out0_7, out0_11)

    def stage1(nout_last):
        return [
            make_dsconv(kg, feat_ch, depth2(128), 3, 1),
            make_dsconv(kg, depth2(128), depth2(128), 3, 1),
            make_dsconv(kg, depth2(128), depth2(128), 3, 1),
            make_dsconv(kg, depth2(128), depth2(512), 1, 1),
            make_dsconv(kg, depth2(512), nout_last, 1, 1, relu=False, final=True),
        ]

    def stageN(nout_last):
        cin = feat_ch + 38 + 19
        return [
            make_dsconv(kg, cin, depth2(128), 3, 1),
            make_dsconv(kg, depth2(128), depth2(128), 3, 1),
            make_dsconv(kg, depth2(128), depth2(128), 3, 1),
            make_dsconv(kg, depth2(128), depth2(128), 1, 1),
            make_dsconv(kg, depth2(128), nout_last, 1, 1, relu=False, final=True),
        ]

    stages = {"model1_1": stage1(38), "model1_2": stage1(19)}
    for st in range(2, 7):
        stages[f"model{st}_1"] = stageN(38)
        stages[f"model{st}_2"] = stageN(19)
    return dict(model0=model0, stages=stages)


# ---------------------------- layer application ----------------------------

def apply_im2col(x, p):
    # Full 3x3 conv (stride s, pad 1) via JAX-side im2col + Pallas matmul+BN(+ReLU).
    N, H, W, C = x.shape
    s = p["stride"]
    Ho = (H - 1) // s + 1
    Wo = (W - 1) // s + 1
    xp = jnp.pad(x, ((0, 0), (1, 1), (1, 1), (0, 0)))
    cols = []
    for kh in range(3):
        for kw in range(3):
            cols.append(xp[:, kh:kh + (Ho - 1) * s + 1:s,
                           kw:kw + (Wo - 1) * s + 1:s, :])
    patches = jnp.concatenate(cols, axis=-1)   # (N, Ho, Wo, 9*C), (kh, kw, cin)
    out = matmul_bn_act(patches.reshape(N * Ho * Wo, 9 * C), p["w"],
                        p["scale"], p["bias"], p["relu"])
    return out.reshape(N, Ho, Wo, p["cout"])


def apply_layer(x, p):
    kind = p["kind"]
    if kind == "im2col":
        return apply_im2col(x, p)
    if kind == "pw":
        N, H, W, C = x.shape
        out = matmul_bn_act(x.reshape(N * H * W, C), p["w"],
                            p["scale"], p["bias"], p["relu"])
        return out.reshape(N, H, W, p["cout"])
    # fused stride-1 3x3 depthwise + pointwise
    return dsconv3_fused(x, p["dw"], p["pw"], p["scale"], p["bias"],
                         p["relu"], p["cout"])


def mobilenet_forward(x, model0):
    hidden = {}
    for i, p in enumerate(model0):
        x = apply_layer(x, p)
        if i == 3:
            hidden["out0_3"] = x
        elif i == 7:
            hidden["out0_7"] = x
        elif i == 11:
            hidden["out0_11"] = x
    out_pool = maxpool2x2(hidden["out0_3"])
    return jnp.concatenate([out_pool, hidden["out0_7"], hidden["out0_11"]], axis=-1)


def run_seq(x, seq):
    for p in seq:
        x = apply_layer(x, p)
    return x


def openpose_forward(x_nchw, params):
    x = jnp.transpose(x_nchw, (0, 2, 3, 1)).astype(jnp.float32)  # NCHW -> NHWC
    features = mobilenet_forward(x, params["model0"])
    saved = []
    out1_1 = run_seq(features, params["stages"]["model1_1"])
    out1_2 = run_seq(features, params["stages"]["model1_2"])
    saved += [out1_1, out1_2]
    fso = jnp.concatenate([out1_1, out1_2, features], axis=-1)
    for st in range(2, 7):
        o1 = run_seq(fso, params["stages"][f"model{st}_1"])
        o2 = run_seq(fso, params["stages"][f"model{st}_2"])
        saved += [o1, o2]
        if st < 6:
            fso = jnp.concatenate([o1, o2, features], axis=-1)
    # Return NCHW to match the PyTorch module's output convention.
    saved_nchw = [jnp.transpose(o, (0, 3, 1, 2)) for o in saved]
    return (saved_nchw[-2], saved_nchw[-1]), saved_nchw


if __name__ == "__main__":
    key = jax.random.PRNGKey(0)
    x = jax.random.normal(key, (2, 3, 16, 16), jnp.float32)  # NCHW, like PyTorch
    params = build_openpose(seed=0)
    (paf, heat), saved = openpose_forward(x, params)
    jax.block_until_ready((paf, heat, saved))
    assert paf.shape == (2, 38, 2, 2), paf.shape
    assert heat.shape == (2, 19, 2, 2), heat.shape
    assert len(saved) == 12
    print("KERNEL_OK")
</pallas_src>

<mosaic_0001>
module attributes {stable_mosaic.version = 11 : i64} {
  func.func @_matmul_bn_act_kernel(%arg0: i32, %arg1: memref<128x27xf32, #tpu.memory_space<vmem>>, %arg2: memref<27x24xbf16, #tpu.memory_space<vmem>>, %arg3: memref<1x24xf32, #tpu.memory_space<vmem>>, %arg4: memref<1x24xf32, #tpu.memory_space<vmem>>, %arg5: memref<128x24xf32, #tpu.memory_space<vmem>>) attributes {dimension_semantics = [#tpu.dimension_semantics<parallel>], iteration_bounds = array<i64: 1>, scalar_prefetch = 0 : i64, scratch_operands = 0 : i64, tpu.core_type = #tpu.core_type<tc>, window_params = [{transform_indices = @transform_0, window_bounds = array<i64: 128, 27>}, {pipeline_mode = #tpu.pipeline_mode<synchronous>, transform_indices = @transform_1, window_bounds = array<i64: 27, 24>}, {pipeline_mode = #tpu.pipeline_mode<synchronous>, transform_indices = @transform_2, window_bounds = array<i64: 1, 24>}, {pipeline_mode = #tpu.pipeline_mode<synchronous>, transform_indices = @transform_3, window_bounds = array<i64: 1, 24>}, {transform_indices = @transform_4, window_bounds = array<i64: 128, 24>}]} {
    %c0 = arith.constant 0 : index
    %c0_0 = arith.constant 0 : index
    %0 = vector.load %arg1[%c0, %c0_0] : memref<128x27xf32, #tpu.memory_space<vmem>>, vector<128x27xf32>
    %1 = arith.truncf %0 : vector<128x27xf32> to vector<128x27xbf16>
    %c0_1 = arith.constant 0 : index
    %c0_2 = arith.constant 0 : index
    %2 = vector.load %arg2[%c0_1, %c0_2] : memref<27x24xbf16, #tpu.memory_space<vmem>>, vector<27x24xbf16>
    %cst = arith.constant dense<0.000000e+00> : vector<128x24xf32>
    %3 = tpu.matmul %1, %2, %cst {dimension_numbers = #tpu.dot_dimension_numbers<[1], [0], [0], [1], [0, 0, 1, 1], [], []>} : vector<128x27xbf16>, vector<27x24xbf16>, vector<128x24xf32> -> vector<128x24xf32>
    %c0_3 = arith.constant 0 : index
    %c0_4 = arith.constant 0 : index
    %4 = vector.load %arg3[%c0_3, %c0_4] : memref<1x24xf32, #tpu.memory_space<vmem>>, vector<1x24xf32>
    %5 = vector.broadcast %4 : vector<1x24xf32> to vector<128x24xf32>
    %6 = arith.mulf %3, %5 : vector<128x24xf32>
    %c0_5 = arith.constant 0 : index
    %c0_6 = arith.constant 0 : index
    %7 = vector.load %arg4[%c0_5, %c0_6] : memref<1x24xf32, #tpu.memory_space<vmem>>, vector<1x24xf32>
    %8 = vector.broadcast %7 : vector<1x24xf32> to vector<128x24xf32>
    %9 = arith.addf %6, %8 : vector<128x24xf32>
    %cst_7 = arith.constant 0.000000e+00 : f32
    %10 = vector.broadcast %cst_7 : f32 to vector<128x24xf32>
    %11 = arith.maximumf %9, %10 : vector<128x24xf32>
    %c0_8 = arith.constant 0 : index
    %c0_9 = arith.constant 0 : index
    %12 = vector.load %arg5[%c0_8, %c0_9] : memref<128x24xf32, #tpu.memory_space<vmem>>, vector<128x24xf32>
    tpu.vector_store %arg5[%c0_8, %c0_9], %11 {strides = array<i32>} : memref<128x24xf32, #tpu.memory_space<vmem>>, vector<128x24xf32>,
    return
  }
  func.func @transform_0(%arg0: i32) -> (i32, i32) {
    %c0_i32 = arith.constant 0 : i32
    %c0_i32_0 = arith.constant 0 : i32
    return %arg0, %c0_i32 : i32, i32
  }
  func.func @transform_1(%arg0: i32) -> (i32, i32) {
    %c0_i32 = arith.constant 0 : i32
    %c0_i32_0 = arith.constant 0 : i32
    %c0_i32_1 = arith.constant 0 : i32
    return %c0_i32, %c0_i32_0 : i32, i32
  }
  func.func @transform_2(%arg0: i32) -> (i32, i32) {
    %c0_i32 = arith.constant 0 : i32
    %c0_i32_0 = arith.constant 0 : i32
    %c0_i32_1 = arith.constant 0 : i32
    return %c0_i32, %c0_i32_0 : i32, i32
  }
  func.func @transform_3(%arg0: i32) -> (i32, i32) {
    %c0_i32 = arith.constant 0 : i32
    %c0_i32_0 = arith.constant 0 : i32
    %c0_i32_1 = arith.constant 0 : i32
    return %c0_i32, %c0_i32_0 : i32, i32
  }
  func.func @transform_4(%arg0: i32) -> (i32, i32) {
    %c0_i32 = arith.constant 0 : i32
    %c0_i32_0 = arith.constant 0 : i32
    return %arg0, %c0_i32 : i32, i32
  }
}

</mosaic_0001>

<llo_original>
// kernel: tpu_custom_call.1
$region0: #{tpu_custom_call.1}
  #allocation0 [shape = 'u32[]', space=smem, size = 0x4, offset = 0x4, fixed_abs, tag = 'smem constant byte address 0x4 - core index']
  #allocation1 [shape = 'u32[144,128]{1,0:T(1,128)}', space=vmem, size = 0x12000, scoped, tag = 'internal scratch']
  %s0 = inlined_call_operand.vmem [shape: f32[128,27], index: 0, kind: input, shape index: {}]
  %s1 = inlined_call_operand.vmem [shape: bf16[27,24], index: 1, kind: input, shape index: {}]
  %s2 = inlined_call_operand.vmem [shape: f32[1,24], index: 2, kind: input, shape index: {}]
  %s3 = inlined_call_operand.vmem [shape: f32[1,24], index: 3, kind: input, shape index: {}]
  %s4 = inlined_call_operand.vmem [shape: f32[128,24], index: 4, kind: output, shape index: {}]
  %s5 = sld [smem:[#allocation0]]
  $region26: #{tpu_custom_call.1} parent=0
    _
  %s7 = ssub.s32 1, %s5
  %s8 = scalar_select 0, %s7, %s5
  // Predicated region
  $region2: #{tpu_custom_call.1} parent=0 // pred_check
    _
  $region3: #{tpu_custom_call.1} parent=0 // pred_check_branch
    %10 = sbr.rel (0) target = $region5
  $region4: #{tpu_custom_call.1} parent=0 // pred_region
    _
  $region5: #{tpu_custom_call.1} parent=0 // pred_fallthru
    _
  // Predicated region
  $region6: #{tpu_custom_call.1} parent=0 // pred_check
    _
  $region7: #{tpu_custom_call.1} parent=0 // pred_check_branch
    %12 = sbr.rel (0) target = $region9
  $region8: #{tpu_custom_call.1} parent=0 // pred_region
    _
  $region9: #{tpu_custom_call.1} parent=0 // pred_fallthru
    _
  // Predicated region
  $region10: #{tpu_custom_call.1} parent=0 // pred_check
    _
  $region11: #{tpu_custom_call.1} parent=0 // pred_check_branch
    %14 = sbr.rel (0) target = $region13
  $region12: #{tpu_custom_call.1} parent=0 // pred_region
    _
  $region13: #{tpu_custom_call.1} parent=0 // pred_fallthru
    _
  // Predicated region
  $region14: #{tpu_custom_call.1} parent=0 // pred_check
    _
  $region15: #{tpu_custom_call.1} parent=0 // pred_check_branch
    %16 = sbr.rel (0) target = $region17
  $region16: #{tpu_custom_call.1} parent=0 // pred_region
    _
  $region17: #{tpu_custom_call.1} parent=0 // pred_fallthru
    _
  %v18 = vld [vmem:[%s0] sm:$0xff]
  %v19 = vld [vmem:[%s0 + $0x8] sm:$0xff]
  %v20 = vld [vmem:[%s0 + $0x10] sm:$0xff]
  %v21 = vld [vmem:[%s0 + $0x18] sm:$0xff]
  %v22 = vld [vmem:[%s0 + $0x20] sm:$0xff]
  %v23 = vld [vmem:[%s0 + $0x28] sm:$0xff]
  %v24 = vld [vmem:[%s0 + $0x30] sm:$0xff]
  %v25 = vld [vmem:[%s0 + $0x38] sm:$0xff]
  %v26 = vld [vmem:[%s0 + $0x40] sm:$0xff]
  %v27 = vld [vmem:[%s0 + $0x48] sm:$0xff]
  %v28 = vld [vmem:[%s0 + $0x50] sm:$0xff]
  %v29 = vld [vmem:[%s0 + $0x58] sm:$0xff]
  %v30 = vld [vmem:[%s0 + $0x60] sm:$0xff]
  %v31 = vld [vmem:[%s0 + $0x68] sm:$0xff]
  %v32 = vld [vmem:[%s0 + $0x70] sm:$0xff]
  %v33 = vld [vmem:[%s0 + $0x78] sm:$0xff]
  %v34 = vpack.c.bf16 %v19, %v18
  %v35 = vpack.c.bf16 %v21, %v20
  %v36 = vpack.c.bf16 %v23, %v22
  %v37 = vpack.c.bf16 %v25, %v24
  %v38 = vpack.c.bf16 %v27, %v26
  %v39 = vpack.c.bf16 %v29, %v28
  %v40 = vpack.c.bf16 %v31, %v30
  %v41 = vpack.c.bf16 %v33, %v32
  %v42 = vld [vmem:[%s1] sm:$0xf]
  %v43 = vld [vmem:[%s1 + $0x4] sm:$0xf]
  %v44 = vld [vmem:[%s1 + $0x8] sm:$0xf]
  %v45 = vld [vmem:[%s1 + $0xc] sm:$0x3]
  %v50 = vunpack.c.l.b16 %v42
  %v51 = vunpack.c.l.b16 %v43
  %v52 = vunpack.c.l.b16 %v44
  %v53 = vunpack.c.l.b16 %v45
  %v54 = vpack.c.b16 %v51, %v50
  %v55 = vpack.c.b16 %v53, %v52
  %vm57 = vcmask 220160
  %v59 = vsel %vm57, %v34, 0
  %v62 = vsel %vm57, %v35, 0
  %v65 = vsel %vm57, %v36, 0
  %v68 = vsel %vm57, %v37, 0
  %v71 = vsel %vm57, %v38, 0
  %v74 = vsel %vm57, %v39, 0
  %v77 = vsel %vm57, %v40, 0
  %v80 = vsel %vm57, %v41, 0
  %vm82 = vcmask 1044480
  %vm83 = vcmask 1045504
  %v84 = vsel %vm82, 4294967295, 65535
  %v85 = vsel %vm83, %v84, 0
  %v87 = vand.u32 %v55, %v85
  %89 = vmatprep.subr.bf16.mxu0 0
  %90 = vmatpush1.bf16.msra.mxu0 0
  %91 = vmatprep.subr.bf16.mxu0 0
  %92 = vmatpush1.bf16.msra.mxu0 0
  %93 = vmatprep.subr.bf16.mxu0 0
  %94 = vmatpush1.bf16.msra.mxu0 0
  %95 = vmatprep.subr.bf16.mxu0 0
  %96 = vmatpush1.bf16.msra.mxu0 0
  %97 = vmatprep.subr.bf16.mxu0 0
  %98 = vmatpush1.bf16.msra.mxu0 0
  %99 = vmatprep.subr.bf16.mxu0 0
  %100 = vmatpush1.bf16.msra.mxu0 0
  %101 = vmatprep.subr.bf16.mxu0 0
  %102 = vmatpush1.bf16.msra.mxu0 %v87
  %103 = vmatprep.subr.bf16.mxu0 0
  %104 = vmatpush1.bf16.msra.mxu0 %v54
  %105 = vmatprep.subr.bf16.mxu0 0
  %106 = vmatpush2.bf16.msra.mxu0 0
  %107 = vmatprep.subr.bf16.mxu0 0
  %108 = vmatpush2.bf16.msra.mxu0 0
  %109 = vmatprep.subr.bf16.mxu0 0
  %110 = vmatpush2.bf16.msra.mxu0 0
  %111 = vmatprep.subr.bf16.mxu0 0
  %112 = vmatpush2.bf16.msra.mxu0 0
  %113 = vmatprep.subr.bf16.mxu0 0
  %114 = vmatpush2.bf16.msra.mxu0 0
  %115 = vmatprep.subr.bf16.mxu0 0
  %116 = vmatpush2.bf16.msra.mxu0 0
  %117 = vmatprep.subr.bf16.mxu0 0
  %118 = vmatpush2.bf16.msra.mxu0 0
  %119 = vmatprep.subr.bf16.mxu0 0
  %120 = vmatpush2.bf16.msra.mxu0 0
  %121 = vmatprep.mubr.bf16.mxu0 0
  %122 = vmatmul.mubr.bf16.gmra.mxu0 %v59
  %v123 = vpop.f32.mrf.mxu0
  %v124 = vadd.f32 0.0, %v123
  %v125 = vpop.f32.mrf.mxu0
  %v126 = vpop.f32.mrf.mxu0
  %v127 = vadd.f32 0.0, %v126
  %v128 = vpop.f32.mrf.mxu0
  %129 = vmatprep.mubr.bf16.mxu0 0
  %130 = vmatmul.mubr.bf16.gmra.mxu0 %v62
  %v131 = vpop.f32.mrf.mxu0
  %v132 = vadd.f32 0.0, %v131
  %v133 = vpop.f32.mrf.mxu0
  %v134 = vpop.f32.mrf.mxu0
  %v135 = vadd.f32 0.0, %v134
  %v136 = vpop.f32.mrf.mxu0
  %137 = vmatprep.mubr.bf16.mxu0 0
  %138 = vmatmul.mubr.bf16.gmra.mxu0 %v65
  %v139 = vpop.f32.mrf.mxu0
  %v140 = vadd.f32 0.0, %v139
  %v141 = vpop.f32.mrf.mxu0
  %v142 = vpop.f32.mrf.mxu0
  %v143 = vadd.f32 0.0, %v142
  %v144 = vpop.f32.mrf.mxu0
  %145 = vmatprep.mubr.bf16.mxu0 0
  %146 = vmatmul.mubr.bf16.gmra.mxu0 %v68
  %v147 = vpop.f32.mrf.mxu0
  %v148 = vadd.f32 0.0, %v147
  %v149 = vpop.f32.mrf.mxu0
  %v150 = vpop.f32.mrf.mxu0
  %v151 = vadd.f32 0.0, %v150
  %v152 = vpop.f32.mrf.mxu0
  %153 = vmatprep.mubr.bf16.mxu0 0
  %154 = vmatmul.mubr.bf16.gmra.mxu0 %v71
  %v155 = vpop.f32.mrf.mxu0
  %v156 = vadd.f32 0.0, %v155
  %v157 = vpop.f32.mrf.mxu0
  %v158 = vpop.f32.mrf.mxu0
  %v159 = vadd.f32 0.0, %v158
  %v160 = vpop.f32.mrf.mxu0
  %161 = vmatprep.mubr.bf16.mxu0 0
  %162 = vmatmul.mubr.bf16.gmra.mxu0 %v74
  %v163 = vpop.f32.mrf.mxu0
  %v164 = vadd.f32 0.0, %v163
  %v165 = vpop.f32.mrf.mxu0
  %v166 = vpop.f32.mrf.mxu0
  %v167 = vadd.f32 0.0, %v166
  %v168 = vpop.f32.mrf.mxu0
  %169 = vmatprep.mubr.bf16.mxu0 0
  %170 = vmatmul.mubr.bf16.gmra.mxu0 %v77
  %v171 = vpop.f32.mrf.mxu0
  %v172 = vadd.f32 0.0, %v171
  %v173 = vpop.f32.mrf.mxu0
  %v174 = vpop.f32.mrf.mxu0
  %v175 = vadd.f32 0.0, %v174
  %v176 = vpop.f32.mrf.mxu0
  %177 = vmatprep.mubr.bf16.mxu0 0
  %178 = vmatmul.mubr.bf16.gmra.mxu0 %v80
  %v179 = vpop.f32.mrf.mxu0
  %v180 = vadd.f32 0.0, %v179
  %v181 = vpop.f32.mrf.mxu0
  %v182 = vpop.f32.mrf.mxu0
  %v183 = vadd.f32 0.0, %v182
  %v184 = vpop.f32.mrf.mxu0
  %185 = vdwg.mxu0
  %v186 = vld [vmem:[%s2] sm:$0x1]
  %v188 = vlaneseq
  %v189 = vshrl.u32 %v188, 7
  %v190 = vsub.s32 0, %v189
  %v191 = vrot.slane %v186, %v190
  %v193 = vmul.f32 %v124, %v191
  %v194 = vmul.f32 %v127, %v191
  %v195 = vmul.f32 %v132, %v191
  %v196 = vmul.f32 %v135, %v191
  %v197 = vmul.f32 %v140, %v191
  %v198 = vmul.f32 %v143, %v191
  %v199 = vmul.f32 %v148, %v191
  %v200 = vmul.f32 %v151, %v191
  %v201 = vmul.f32 %v156, %v191
  %v202 = vmul.f32 %v159, %v191
  %v203 = vmul.f32 %v164, %v191
  %v204 = vmul.f32 %v167, %v191
  %v205 = vmul.f32 %v172, %v191
  %v206 = vmul.f32 %v175, %v191
  %v207 = vmul.f32 %v180, %v191
  %v208 = vmul.f32 %v183, %v191
  %v209 = vld [vmem:[%s3] sm:$0x1]
  %v211 = vlaneseq
  %v212 = vshrl.u32 %v211, 7
  %v213 = vsub.s32 0, %v212
  %v214 = vrot.slane %v209, %v213
  %v216 = vadd.f32 %v193, %v214
  %v217 = vadd.f32 %v194, %v214
  %v218 = vadd.f32 %v195, %v214
  %v219 = vadd.f32 %v196, %v214
  %v220 = vadd.f32 %v197, %v214
  %v221 = vadd.f32 %v198, %v214
  %v222 = vadd.f32 %v199, %v214
  %v223 = vadd.f32 %v200, %v214
  %v224 = vadd.f32 %v201, %v214
  %v225 = vadd.f32 %v202, %v214
  %v226 = vadd.f32 %v203, %v214
  %v227 = vadd.f32 %v204, %v214
  %v228 = vadd.f32 %v205, %v214
  %v229 = vadd.f32 %v206, %v214
  %v230 = vadd.f32 %v207, %v214
  %v231 = vadd.f32 %v208, %v214
  %v232 = vmax.f32 %v216, 0.0
  %v233 = vmax.f32 %v217, 0.0
  %v234 = vmax.f32 %v218, 0.0
  %v235 = vmax.f32 %v219, 0.0
  %v236 = vmax.f32 %v220, 0.0
  %v237 = vmax.f32 %v221, 0.0
  %v238 = vmax.f32 %v222, 0.0
  %v239 = vmax.f32 %v223, 0.0
  %v240 = vmax.f32 %v224, 0.0
  %v241 = vmax.f32 %v225, 0.0
  %v242 = vmax.f32 %v226, 0.0
  %v243 = vmax.f32 %v227, 0.0
  %v244 = vmax.f32 %v228, 0.0
  %v245 = vmax.f32 %v229, 0.0
  %v246 = vmax.f32 %v230, 0.0
  %v247 = vmax.f32 %v231, 0.0
  %vm248 = vcmask 195584
  %249 = vst.msk [vmem:[%s4] sm:$0xff] %vm248, %v232
  %250 = vst.msk [vmem:[%s4 + $0x8] sm:$0xff] %vm248, %v233
  %251 = vst.msk [vmem:[%s4 + $0x10] sm:$0xff] %vm248, %v234
  %252 = vst.msk [vmem:[%s4 + $0x18] sm:$0xff] %vm248, %v235
  %253 = vst.msk [vmem:[%s4 + $0x20] sm:$0xff] %vm248, %v236
  %254 = vst.msk [vmem:[%s4 + $0x28] sm:$0xff] %vm248, %v237
  %255 = vst.msk [vmem:[%s4 + $0x30] sm:$0xff] %vm248, %v238
  %256 = vst.msk [vmem:[%s4 + $0x38] sm:$0xff] %vm248, %v239
  %257 = vst.msk [vmem:[%s4 + $0x40] sm:$0xff] %vm248, %v240
  %258 = vst.msk [vmem:[%s4 + $0x48] sm:$0xff] %vm248, %v241
  %259 = vst.msk [vmem:[%s4 + $0x50] sm:$0xff] %vm248, %v242
  %260 = vst.msk [vmem:[%s4 + $0x58] sm:$0xff] %vm248, %v243
  %261 = vst.msk [vmem:[%s4 + $0x60] sm:$0xff] %vm248, %v244
  %262 = vst.msk [vmem:[%s4 + $0x68] sm:$0xff] %vm248, %v245
  %263 = vst.msk [vmem:[%s4 + $0x70] sm:$0xff] %vm248, %v246
  %264 = vst.msk [vmem:[%s4 + $0x78] sm:$0xff] %vm248, %v247
  // Predicated region
  $region18: #{tpu_custom_call.1} parent=0 // pred_check
    _
  $region19: #{tpu_custom_call.1} parent=0 // pred_check_branch
    %266 = sbr.rel (0) target = $region21
  $region20: #{tpu_custom_call.1} parent=0 // pred_region
    _
  $region21: #{tpu_custom_call.1} parent=0 // pred_fallthru
    _
  // Predicated region
  $region22: #{tpu_custom_call.1} parent=0 // pred_check
    _
  $region23: #{tpu_custom_call.1} parent=0 // pred_check_branch
    %268 = sbr.rel (0) target = $region25
  $region24: #{tpu_custom_call.1} parent=0 // pred_region
    _
  $region25: #{tpu_custom_call.1} parent=0 // pred_fallthru
    _

</llo_original>
